<compile_context>
chip_gen: v6e
topology: v6e:2x2x1
jax: 0.10.0
libtpu: 0.0.40
codegen_flags: <defaults>
</compile_context>

<pallas_src>
import jax
import jax.numpy as jnp
from jax.experimental import pallas as pl
from jax.experimental.pallas import tpu as pltpu


def _make_kernel(C, H, W, KH, KW, SH, SW, P0, P1, OH, OW, has_bias):
    """Builds the single-invocation depthwise-correlation kernel."""

    def kernel(x_ref, w_ref, b_ref, o_ref, xp_ref):
        # x_ref : (C, H, W)     unpadded input, VMEM
        # w_ref : (C*KH*KW,)    filter taps, SMEM (scalar reads)
        # b_ref : (1,)          scalar bias, SMEM
        # o_ref : (C, OH, OW)   output, VMEM
        # xp_ref: (C, HP, WP)   padded-input scratch, VMEM
        # Fused zero padding: zero the scratch, copy the input into its interior.
        xp_ref[...] = jnp.zeros_like(xp_ref)
        xp_ref[:, pl.ds(P0, H), pl.ds(P1, W)] = x_ref[...]

        if has_bias:
            bias = b_ref[0]                          # hoisted SMEM scalar read

        # C*KH*KW is tiny & static -> fully unrolled shift-and-scale accumulation.
        for c in range(C):
            xc = xp_ref[c]                           # (HP, WP) single VMEM load
            acc = jnp.zeros((OH, OW), jnp.float32)
            for dh in range(KH):
                for dw in range(KW):
                    if SH == 1 and SW == 1:
                        # stride-1 common case: static, unstrided slice
                        win = xc[dh:dh + OH, dw:dw + OW]
                    else:
                        win = jax.lax.slice(
                            xc,
                            (dh, dw),
                            (dh + SH * (OH - 1) + 1, dw + SW * (OW - 1) + 1),
                            (SH, SW),
                        )                            # (OH, OW)
                    wv = w_ref[c * KH * KW + dh * KW + dw]   # SMEM scalar tap
                    acc = acc + wv * win             # scalar-splat MAC on the VPU
            if has_bias:
                acc = acc + bias
            o_ref[c] = acc

    return kernel


def cpu_conv2d_pallas(x, weights, s=(1, 1), p=(1, 1), bias=None):
    """x: (C, H, W); weights: (o_ch, KH, KW); bias: None / scalar / (1,) array.

    Returns (o_ch, OH, OW) float32, matching CPUConv2D.forward.
    """
    C, H, W = x.shape
    o_ch, KH, KW = weights.shape
    assert o_ch <= C, "module indexes X[i] for i in range(o_ch)"
    SH, SW = s
    P0, P1 = p
    OH = (H - KH + 2 * P0) // SH + 1
    OW = (W - KW + 2 * P1) // SW + 1
    HP, WP = H + 2 * P0, W + 2 * P1

    has_bias = bias is not None
    b_arr = (jnp.asarray(bias, jnp.float32).reshape((1,)) if has_bias
             else jnp.zeros((1,), jnp.float32))
    w_flat = weights.astype(jnp.float32).reshape(-1)   # (o_ch*KH*KW,) -> SMEM scalars
    x_in = x[:o_ch].astype(jnp.float32)

    kernel = _make_kernel(o_ch, H, W, KH, KW, SH, SW, P0, P1, OH, OW, has_bias)

    return pl.pallas_call(
        kernel,
        out_shape=jax.ShapeDtypeStruct((o_ch, OH, OW), jnp.float32),
        in_specs=[
            pl.BlockSpec(memory_space=pltpu.MemorySpace.VMEM),   # x: whole array
            pl.BlockSpec(memory_space=pltpu.MemorySpace.SMEM),   # filter taps
            pl.BlockSpec(memory_space=pltpu.MemorySpace.SMEM),   # scalar bias
        ],
        out_specs=pl.BlockSpec(memory_space=pltpu.MemorySpace.VMEM),
        scratch_shapes=[pltpu.VMEM((o_ch, HP, WP), jnp.float32)],  # fused-pad scratch
    )(x_in, w_flat, b_arr)


if __name__ == "__main__":
    # CPUConv2D(i_ch=4, o_ch=4, k=3, s=1, p=1, group=4)
    i_ch, o_ch, k, s, p, group = 4, 4, 3, 1, 1, 4
    H = W = 16

    key = jax.random.PRNGKey(0)
    kx, kw, kb = jax.random.split(key, 3)
    X = jax.random.normal(kx, (i_ch, H, W), dtype=jnp.float32)
    # ParameterList of o_ch tensors of shape (i_ch // group, k, k) == (1, k, k),
    # initialized deterministically (stand-in for torch.randn).
    Wfull = jax.random.normal(kw, (o_ch, i_ch // group, k, k), dtype=jnp.float32)
    Wdw = Wfull[:, 0]                                   # (o_ch, k, k)
    bias_val = jax.random.normal(kb, (1,), dtype=jnp.float32)

    # Pure-JAX reference of the module's forward (depthwise correlation).
    OH = (H - k + 2 * p) // s + 1
    OW = (W - k + 2 * p) // s + 1
    xp_pad = jnp.pad(X, ((0, 0), (p, p), (p, p)))
    ref = jnp.zeros((o_ch, OH, OW), jnp.float32)
    for i in range(o_ch):
        for dh in range(k):
            for dw in range(k):
                ref = ref.at[i].add(
                    Wdw[i, dh, dw] * xp_pad[i, dh:dh + OH, dw:dw + OW])

    # bias=False path (module default)
    out = jax.block_until_ready(
        cpu_conv2d_pallas(X, Wdw, s=(s, s), p=(p, p), bias=None))
    assert out.shape == (o_ch, OH, OW)
    assert jnp.allclose(out, ref, atol=1e-5, rtol=1e-5)

    # bias=True path (scalar bias fused in-kernel)
    out_b = jax.block_until_ready(
        cpu_conv2d_pallas(X, Wdw, s=(s, s), p=(p, p), bias=bias_val))
    assert jnp.allclose(out_b, ref + bias_val[0], atol=1e-5, rtol=1e-5)

    print("KERNEL_OK")
</pallas_src>

<mosaic_0001>
module attributes {stable_mosaic.version = 11 : i64} {
  func.func @kernel(%arg0: memref<4x16x16xf32, #tpu.memory_space<vmem>>, %arg1: memref<36xf32, #tpu.memory_space<smem>>, %arg2: memref<1xf32, #tpu.memory_space<smem>>, %arg3: memref<4x16x16xf32, #tpu.memory_space<vmem>>, %arg4: memref<4x18x18xf32, #tpu.memory_space<vmem>>) attributes {dimension_semantics = [], scalar_prefetch = 0 : i64, scratch_operands = 1 : i64, tpu.core_type = #tpu.core_type<tc>} {
    %cst = arith.constant 0.000000e+00 : f32
    %0 = vector.broadcast %cst : f32 to vector<4x18x18xf32>
    %c0 = arith.constant 0 : index
    %c0_0 = arith.constant 0 : index
    %c0_1 = arith.constant 0 : index
    %1 = vector.load %arg4[%c0, %c0_0, %c0_1] : memref<4x18x18xf32, #tpu.memory_space<vmem>>, vector<4x18x18xf32>
    tpu.vector_store %arg4[%c0, %c0_0, %c0_1], %0 {strides = array<i32>} : memref<4x18x18xf32, #tpu.memory_space<vmem>>, vector<4x18x18xf32>,
    %c0_2 = arith.constant 0 : index
    %c0_3 = arith.constant 0 : index
    %c0_4 = arith.constant 0 : index
    %2 = vector.load %arg0[%c0_2, %c0_3, %c0_4] : memref<4x16x16xf32, #tpu.memory_space<vmem>>, vector<4x16x16xf32>
    %c0_5 = arith.constant 0 : index
    %c1 = arith.constant 1 : index
    %c1_6 = arith.constant 1 : index
    %3 = vector.load %arg4[%c0_5, %c1, %c1_6] : memref<4x18x18xf32, #tpu.memory_space<vmem>>, vector<4x16x16xf32>
    tpu.vector_store %arg4[%c0_5, %c1, %c1_6], %2 {strides = array<i32>} : memref<4x18x18xf32, #tpu.memory_space<vmem>>, vector<4x16x16xf32>,
    %c0_7 = arith.constant 0 : index
    %c0_8 = arith.constant 0 : index
    %c0_9 = arith.constant 0 : index
    %4 = vector.load %arg4[%c0_7, %c0_8, %c0_9] : memref<4x18x18xf32, #tpu.memory_space<vmem>>, vector<1x18x18xf32>
    %5 = vector.shape_cast %4 : vector<1x18x18xf32> to vector<18x18xf32>
    %cst_10 = arith.constant 0.000000e+00 : f32
    %6 = vector.broadcast %cst_10 : f32 to vector<16x16xf32>
    %7 = vector.extract_strided_slice %5 {offsets = [0, 0], sizes = [16, 16], strides = [1, 1]} : vector<18x18xf32> to vector<16x16xf32>
    %c0_11 = arith.constant 0 : index
    %8 = memref.load %arg1[%c0_11] : memref<36xf32, #tpu.memory_space<smem>>
    %9 = vector.broadcast %8 : f32 to vector<16x16xf32>
    %10 = arith.mulf %9, %7 : vector<16x16xf32>
    %11 = arith.addf %6, %10 : vector<16x16xf32>
    %12 = vector.extract_strided_slice %5 {offsets = [0, 1], sizes = [16, 16], strides = [1, 1]} : vector<18x18xf32> to vector<16x16xf32>
    %c1_12 = arith.constant 1 : index
    %13 = memref.load %arg1[%c1_12] : memref<36xf32, #tpu.memory_space<smem>>
    %14 = vector.broadcast %13 : f32 to vector<16x16xf32>
    %15 = arith.mulf %14, %12 : vector<16x16xf32>
    %16 = arith.addf %11, %15 : vector<16x16xf32>
    %17 = vector.extract_strided_slice %5 {offsets = [0, 2], sizes = [16, 16], strides = [1, 1]} : vector<18x18xf32> to vector<16x16xf32>
    %c2 = arith.constant 2 : index
    %18 = memref.load %arg1[%c2] : memref<36xf32, #tpu.memory_space<smem>>
    %19 = vector.broadcast %18 : f32 to vector<16x16xf32>
    %20 = arith.mulf %19, %17 : vector<16x16xf32>
    %21 = arith.addf %16, %20 : vector<16x16xf32>
    %22 = vector.extract_strided_slice %5 {offsets = [1, 0], sizes = [16, 16], strides = [1, 1]} : vector<18x18xf32> to vector<16x16xf32>
    %c3 = arith.constant 3 : index
    %23 = memref.load %arg1[%c3] : memref<36xf32, #tpu.memory_space<smem>>
    %24 = vector.broadcast %23 : f32 to vector<16x16xf32>
    %25 = arith.mulf %24, %22 : vector<16x16xf32>
    %26 = arith.addf %21, %25 : vector<16x16xf32>
    %27 = vector.extract_strided_slice %5 {offsets = [1, 1], sizes = [16, 16], strides = [1, 1]} : vector<18x18xf32> to vector<16x16xf32>
    %c4 = arith.constant 4 : index
    %28 = memref.load %arg1[%c4] : memref<36xf32, #tpu.memory_space<smem>>
    %29 = vector.broadcast %28 : f32 to vector<16x16xf32>
    %30 = arith.mulf %29, %27 : vector<16x16xf32>
    %31 = arith.addf %26, %30 : vector<16x16xf32>
    %32 = vector.extract_strided_slice %5 {offsets = [1, 2], sizes = [16, 16], strides = [1, 1]} : vector<18x18xf32> to vector<16x16xf32>
    %c5 = arith.constant 5 : index
    %33 = memref.load %arg1[%c5] : memref<36xf32, #tpu.memory_space<smem>>
    %34 = vector.broadcast %33 : f32 to vector<16x16xf32>
    %35 = arith.mulf %34, %32 : vector<16x16xf32>
    %36 = arith.addf %31, %35 : vector<16x16xf32>
    %37 = vector.extract_strided_slice %5 {offsets = [2, 0], sizes = [16, 16], strides = [1, 1]} : vector<18x18xf32> to vector<16x16xf32>
    %c6 = arith.constant 6 : index
    %38 = memref.load %arg1[%c6] : memref<36xf32, #tpu.memory_space<smem>>
    %39 = vector.broadcast %38 : f32 to vector<16x16xf32>
    %40 = arith.mulf %39, %37 : vector<16x16xf32>
    %41 = arith.addf %36, %40 : vector<16x16xf32>
    %42 = vector.extract_strided_slice %5 {offsets = [2, 1], sizes = [16, 16], strides = [1, 1]} : vector<18x18xf32> to vector<16x16xf32>
    %c7 = arith.constant 7 : index
    %43 = memref.load %arg1[%c7] : memref<36xf32, #tpu.memory_space<smem>>
    %44 = vector.broadcast %43 : f32 to vector<16x16xf32>
    %45 = arith.mulf %44, %42 : vector<16x16xf32>
    %46 = arith.addf %41, %45 : vector<16x16xf32>
    %47 = vector.extract_strided_slice %5 {offsets = [2, 2], sizes = [16, 16], strides = [1, 1]} : vector<18x18xf32> to vector<16x16xf32>
    %c8 = arith.constant 8 : index
    %48 = memref.load %arg1[%c8] : memref<36xf32, #tpu.memory_space<smem>>
    %49 = vector.broadcast %48 : f32 to vector<16x16xf32>
    %50 = arith.mulf %49, %47 : vector<16x16xf32>
    %51 = arith.addf %46, %50 : vector<16x16xf32>
    %c0_13 = arith.constant 0 : index
    %c0_14 = arith.constant 0 : index
    %c0_15 = arith.constant 0 : index
    %52 = vector.load %arg3[%c0_13, %c0_14, %c0_15] : memref<4x16x16xf32, #tpu.memory_space<vmem>>, vector<1x16x16xf32>
    %53 = vector.shape_cast %52 : vector<1x16x16xf32> to vector<16x16xf32>
    %54 = vector.shape_cast %51 : vector<16x16xf32> to vector<1x16x16xf32>
    tpu.vector_store %arg3[%c0_13, %c0_14, %c0_15], %54 {strides = array<i32>} : memref<4x16x16xf32, #tpu.memory_space<vmem>>, vector<1x16x16xf32>,
    %c1_16 = arith.constant 1 : index
    %c0_17 = arith.constant 0 : index
    %c0_18 = arith.constant 0 : index
    %55 = vector.load %arg4[%c1_16, %c0_17, %c0_18] : memref<4x18x18xf32, #tpu.memory_space<vmem>>, vector<1x18x18xf32>
    %56 = vector.shape_cast %55 : vector<1x18x18xf32> to vector<18x18xf32>
    %cst_19 = arith.constant 0.000000e+00 : f32
    %57 = vector.broadcast %cst_19 : f32 to vector<16x16xf32>
    %58 = vector.extract_strided_slice %56 {offsets = [0, 0], sizes = [16, 16], strides = [1, 1]} : vector<18x18xf32> to vector<16x16xf32>
    %c9 = arith.constant 9 : index
    %59 = memref.load %arg1[%c9] : memref<36xf32, #tpu.memory_space<smem>>
    %60 = vector.broadcast %59 : f32 to vector<16x16xf32>
    %61 = arith.mulf %60, %58 : vector<16x16xf32>
    %62 = arith.addf %57, %61 : vector<16x16xf32>
    %63 = vector.extract_strided_slice %56 {offsets = [0, 1], sizes = [16, 16], strides = [1, 1]} : vector<18x18xf32> to vector<16x16xf32>
    %c10 = arith.constant 10 : index
    %64 = memref.load %arg1[%c10] : memref<36xf32, #tpu.memory_space<smem>>
    %65 = vector.broadcast %64 : f32 to vector<16x16xf32>
    %66 = arith.mulf %65, %63 : vector<16x16xf32>
    %67 = arith.addf %62, %66 : vector<16x16xf32>
    %68 = vector.extract_strided_slice %56 {offsets = [0, 2], sizes = [16, 16], strides = [1, 1]} : vector<18x18xf32> to vector<16x16xf32>
    %c11 = arith.constant 11 : index
    %69 = memref.load %arg1[%c11] : memref<36xf32, #tpu.memory_space<smem>>
    %70 = vector.broadcast %69 : f32 to vector<16x16xf32>
    %71 = arith.mulf %70, %68 : vector<16x16xf32>
    %72 = arith.addf %67, %71 : vector<16x16xf32>
    %73 = vector.extract_strided_slice %56 {offsets = [1, 0], sizes = [16, 16], strides = [1, 1]} : vector<18x18xf32> to vector<16x16xf32>
    %c12 = arith.constant 12 : index
    %74 = memref.load %arg1[%c12] : memref<36xf32, #tpu.memory_space<smem>>
    %75 = vector.broadcast %74 : f32 to vector<16x16xf32>
    %76 = arith.mulf %75, %73 : vector<16x16xf32>
    %77 = arith.addf %72, %76 : vector<16x16xf32>
    %78 = vector.extract_strided_slice %56 {offsets = [1, 1], sizes = [16, 16], strides = [1, 1]} : vector<18x18xf32> to vector<16x16xf32>
    %c13 = arith.constant 13 : index
    %79 = memref.load %arg1[%c13] : memref<36xf32, #tpu.memory_space<smem>>
    %80 = vector.broadcast %79 : f32 to vector<16x16xf32>
    %81 = arith.mulf %80, %78 : vector<16x16xf32>
    %82 = arith.addf %77, %81 : vector<16x16xf32>
    %83 = vector.extract_strided_slice %56 {offsets = [1, 2], sizes = [16, 16], strides = [1, 1]} : vector<18x18xf32> to vector<16x16xf32>
    %c14 = arith.constant 14 : index
    %84 = memref.load %arg1[%c14] : memref<36xf32, #tpu.memory_space<smem>>
    %85 = vector.broadcast %84 : f32 to vector<16x16xf32>
    %86 = arith.mulf %85, %83 : vector<16x16xf32>
    %87 = arith.addf %82, %86 : vector<16x16xf32>
    %88 = vector.extract_strided_slice %56 {offsets = [2, 0], sizes = [16, 16], strides = [1, 1]} : vector<18x18xf32> to vector<16x16xf32>
    %c15 = arith.constant 15 : index
    %89 = memref.load %arg1[%c15] : memref<36xf32, #tpu.memory_space<smem>>
    %90 = vector.broadcast %89 : f32 to vector<16x16xf32>
    %91 = arith.mulf %90, %88 : vector<16x16xf32>
    %92 = arith.addf %87, %91 : vector<16x16xf32>
    %93 = vector.extract_strided_slice %56 {offsets = [2, 1], sizes = [16, 16], strides = [1, 1]} : vector<18x18xf32> to vector<16x16xf32>
    %c16 = arith.constant 16 : index
    %94 = memref.load %arg1[%c16] : memref<36xf32, #tpu.memory_space<smem>>
    %95 = vector.broadcast %94 : f32 to vector<16x16xf32>
    %96 = arith.mulf %95, %93 : vector<16x16xf32>
    %97 = arith.addf %92, %96 : vector<16x16xf32>
    %98 = vector.extract_strided_slice %56 {offsets = [2, 2], sizes = [16, 16], strides = [1, 1]} : vector<18x18xf32> to vector<16x16xf32>
    %c17 = arith.constant 17 : index
    %99 = memref.load %arg1[%c17] : memref<36xf32, #tpu.memory_space<smem>>
    %100 = vector.broadcast %99 : f32 to vector<16x16xf32>
    %101 = arith.mulf %100, %98 : vector<16x16xf32>
    %102 = arith.addf %97, %101 : vector<16x16xf32>
    %c1_20 = arith.constant 1 : index
    %c0_21 = arith.constant 0 : index
    %c0_22 = arith.constant 0 : index
    %103 = vector.load %arg3[%c1_20, %c0_21, %c0_22] : memref<4x16x16xf32, #tpu.memory_space<vmem>>, vector<1x16x16xf32>
    %104 = vector.shape_cast %103 : vector<1x16x16xf32> to vector<16x16xf32>
    %105 = vector.shape_cast %102 : vector<16x16xf32> to vector<1x16x16xf32>
    tpu.vector_store %arg3[%c1_20, %c0_21, %c0_22], %105 {strides = array<i32>} : memref<4x16x16xf32, #tpu.memory_space<vmem>>, vector<1x16x16xf32>,
    %c2_23 = arith.constant 2 : index
    %c0_24 = arith.constant 0 : index
    %c0_25 = arith.constant 0 : index
    %106 = vector.load %arg4[%c2_23, %c0_24, %c0_25] : memref<4x18x18xf32, #tpu.memory_space<vmem>>, vector<1x18x18xf32>
    %107 = vector.shape_cast %106 : vector<1x18x18xf32> to vector<18x18xf32>
    %cst_26 = arith.constant 0.000000e+00 : f32
    %108 = vector.broadcast %cst_26 : f32 to vector<16x16xf32>
    %109 = vector.extract_strided_slice %107 {offsets = [0, 0], sizes = [16, 16], strides = [1, 1]} : vector<18x18xf32> to vector<16x16xf32>
    %c18 = arith.constant 18 : index
    %110 = memref.load %arg1[%c18] : memref<36xf32, #tpu.memory_space<smem>>
    %111 = vector.broadcast %110 : f32 to vector<16x16xf32>
    %112 = arith.mulf %111, %109 : vector<16x16xf32>
    %113 = arith.addf %108, %112 : vector<16x16xf32>
    %114 = vector.extract_strided_slice %107 {offsets = [0, 1], sizes = [16, 16], strides = [1, 1]} : vector<18x18xf32> to vector<16x16xf32>
    %c19 = arith.constant 19 : index
    %115 = memref.load %arg1[%c19] : memref<36xf32, #tpu.memory_space<smem>>
    %116 = vector.broadcast %115 : f32 to vector<16x16xf32>
    %117 = arith.mulf %116, %114 : vector<16x16xf32>
    %118 = arith.addf %113, %117 : vector<16x16xf32>
    %119 = vector.extract_strided_slice %107 {offsets = [0, 2], sizes = [16, 16], strides = [1, 1]} : vector<18x18xf32> to vector<16x16xf32>
    %c20 = arith.constant 20 : index
    %120 = memref.load %arg1[%c20] : memref<36xf32, #tpu.memory_space<smem>>
    %121 = vector.broadcast %120 : f32 to vector<16x16xf32>
    %122 = arith.mulf %121, %119 : vector<16x16xf32>
    %123 = arith.addf %118, %122 : vector<16x16xf32>
    %124 = vector.extract_strided_slice %107 {offsets = [1, 0], sizes = [16, 16], strides = [1, 1]} : vector<18x18xf32> to vector<16x16xf32>
    %c21 = arith.constant 21 : index
    %125 = memref.load %arg1[%c21] : memref<36xf32, #tpu.memory_space<smem>>
    %126 = vector.broadcast %125 : f32 to vector<16x16xf32>
    %127 = arith.mulf %126, %124 : vector<16x16xf32>
    %128 = arith.addf %123, %127 : vector<16x16xf32>
    %129 = vector.extract_strided_slice %107 {offsets = [1, 1], sizes = [16, 16], strides = [1, 1]} : vector<18x18xf32> to vector<16x16xf32>
    %c22 = arith.constant 22 : index
    %130 = memref.load %arg1[%c22] : memref<36xf32, #tpu.memory_space<smem>>
    %131 = vector.broadcast %130 : f32 to vector<16x16xf32>
    %132 = arith.mulf %131, %129 : vector<16x16xf32>
    %133 = arith.addf %128, %132 : vector<16x16xf32>
    %134 = vector.extract_strided_slice %107 {offsets = [1, 2], sizes = [16, 16], strides = [1, 1]} : vector<18x18xf32> to vector<16x16xf32>
    %c23 = arith.constant 23 : index
    %135 = memref.load %arg1[%c23] : memref<36xf32, #tpu.memory_space<smem>>
    %136 = vector.broadcast %135 : f32 to vector<16x16xf32>
    %137 = arith.mulf %136, %134 : vector<16x16xf32>
    %138 = arith.addf %133, %137 : vector<16x16xf32>
    %139 = vector.extract_strided_slice %107 {offsets = [2, 0], sizes = [16, 16], strides = [1, 1]} : vector<18x18xf32> to vector<16x16xf32>
    %c24 = arith.constant 24 : index
    %140 = memref.load %arg1[%c24] : memref<36xf32, #tpu.memory_space<smem>>
    %141 = vector.broadcast %140 : f32 to vector<16x16xf32>
    %142 = arith.mulf %141, %139 : vector<16x16xf32>
    %143 = arith.addf %138, %142 : vector<16x16xf32>
    %144 = vector.extract_strided_slice %107 {offsets = [2, 1], sizes = [16, 16], strides = [1, 1]} : vector<18x18xf32> to vector<16x16xf32>
    %c25 = arith.constant 25 : index
    %145 = memref.load %arg1[%c25] : memref<36xf32, #tpu.memory_space<smem>>
    %146 = vector.broadcast %145 : f32 to vector<16x16xf32>
    %147 = arith.mulf %146, %144 : vector<16x16xf32>
    %148 = arith.addf %143, %147 : vector<16x16xf32>
    %149 = vector.extract_strided_slice %107 {offsets = [2, 2], sizes = [16, 16], strides = [1, 1]} : vector<18x18xf32> to vector<16x16xf32>
    %c26 = arith.constant 26 : index
    %150 = memref.load %arg1[%c26] : memref<36xf32, #tpu.memory_space<smem>>
    %151 = vector.broadcast %150 : f32 to vector<16x16xf32>
    %152 = arith.mulf %151, %149 : vector<16x16xf32>
    %153 = arith.addf %148, %152 : vector<16x16xf32>
    %c2_27 = arith.constant 2 : index
    %c0_28 = arith.constant 0 : index
    %c0_29 = arith.constant 0 : index
    %154 = vector.load %arg3[%c2_27, %c0_28, %c0_29] : memref<4x16x16xf32, #tpu.memory_space<vmem>>, vector<1x16x16xf32>
    %155 = vector.shape_cast %154 : vector<1x16x16xf32> to vector<16x16xf32>
    %156 = vector.shape_cast %153 : vector<16x16xf32> to vector<1x16x16xf32>
    tpu.vector_store %arg3[%c2_27, %c0_28, %c0_29], %156 {strides = array<i32>} : memref<4x16x16xf32, #tpu.memory_space<vmem>>, vector<1x16x16xf32>,
    %c3_30 = arith.constant 3 : index
    %c0_31 = arith.constant 0 : index
    %c0_32 = arith.constant 0 : index
    %157 = vector.load %arg4[%c3_30, %c0_31, %c0_32] : memref<4x18x18xf32, #tpu.memory_space<vmem>>, vector<1x18x18xf32>
    %158 = vector.shape_cast %157 : vector<1x18x18xf32> to vector<18x18xf32>
    %cst_33 = arith.constant 0.000000e+00 : f32
    %159 = vector.broadcast %cst_33 : f32 to vector<16x16xf32>
    %160 = vector.extract_strided_slice %158 {offsets = [0, 0], sizes = [16, 16], strides = [1, 1]} : vector<18x18xf32> to vector<16x16xf32>
    %c27 = arith.constant 27 : index
    %161 = memref.load %arg1[%c27] : memref<36xf32, #tpu.memory_space<smem>>
    %162 = vector.broadcast %161 : f32 to vector<16x16xf32>
    %163 = arith.mulf %162, %160 : vector<16x16xf32>
    %164 = arith.addf %159, %163 : vector<16x16xf32>
    %165 = vector.extract_strided_slice %158 {offsets = [0, 1], sizes = [16, 16], strides = [1, 1]} : vector<18x18xf32> to vector<16x16xf32>
    %c28 = arith.constant 28 : index
    %166 = memref.load %arg1[%c28] : memref<36xf32, #tpu.memory_space<smem>>
    %167 = vector.broadcast %166 : f32 to vector<16x16xf32>
    %168 = arith.mulf %167, %165 : vector<16x16xf32>
    %169 = arith.addf %164, %168 : vector<16x16xf32>
    %170 = vector.extract_strided_slice %158 {offsets = [0, 2], sizes = [16, 16], strides = [1, 1]} : vector<18x18xf32> to vector<16x16xf32>
    %c29 = arith.constant 29 : index
    %171 = memref.load %arg1[%c29] : memref<36xf32, #tpu.memory_space<smem>>
    %172 = vector.broadcast %171 : f32 to vector<16x16xf32>
    %173 = arith.mulf %172, %170 : vector<16x16xf32>
    %174 = arith.addf %169, %173 : vector<16x16xf32>
    %175 = vector.extract_strided_slice %158 {offsets = [1, 0], sizes = [16, 16], strides = [1, 1]} : vector<18x18xf32> to vector<16x16xf32>
    %c30 = arith.constant 30 : index
    %176 = memref.load %arg1[%c30] : memref<36xf32, #tpu.memory_space<smem>>
    %177 = vector.broadcast %176 : f32 to vector<16x16xf32>
    %178 = arith.mulf %177, %175 : vector<16x16xf32>
    %179 = arith.addf %174, %178 : vector<16x16xf32>
    %180 = vector.extract_strided_slice %158 {offsets = [1, 1], sizes = [16, 16], strides = [1, 1]} : vector<18x18xf32> to vector<16x16xf32>
    %c31 = arith.constant 31 : index
    %181 = memref.load %arg1[%c31] : memref<36xf32, #tpu.memory_space<smem>>
    %182 = vector.broadcast %181 : f32 to vector<16x16xf32>
    %183 = arith.mulf %182, %180 : vector<16x16xf32>
    %184 = arith.addf %179, %183 : vector<16x16xf32>
    %185 = vector.extract_strided_slice %158 {offsets = [1, 2], sizes = [16, 16], strides = [1, 1]} : vector<18x18xf32> to vector<16x16xf32>
    %c32 = arith.constant 32 : index
    %186 = memref.load %arg1[%c32] : memref<36xf32, #tpu.memory_space<smem>>
    %187 = vector.broadcast %186 : f32 to vector<16x16xf32>
    %188 = arith.mulf %187, %185 : vector<16x16xf32>
    %189 = arith.addf %184, %188 : vector<16x16xf32>
    %190 = vector.extract_strided_slice %158 {offsets = [2, 0], sizes = [16, 16], strides = [1, 1]} : vector<18x18xf32> to vector<16x16xf32>
    %c33 = arith.constant 33 : index
    %191 = memref.load %arg1[%c33] : memref<36xf32, #tpu.memory_space<smem>>
    %192 = vector.broadcast %191 : f32 to vector<16x16xf32>
    %193 = arith.mulf %192, %190 : vector<16x16xf32>
    %194 = arith.addf %189, %193 : vector<16x16xf32>
    %195 = vector.extract_strided_slice %158 {offsets = [2, 1], sizes = [16, 16], strides = [1, 1]} : vector<18x18xf32> to vector<16x16xf32>
    %c34 = arith.constant 34 : index
    %196 = memref.load %arg1[%c34] : memref<36xf32, #tpu.memory_space<smem>>
    %197 = vector.broadcast %196 : f32 to vector<16x16xf32>
    %198 = arith.mulf %197, %195 : vector<16x16xf32>
    %199 = arith.addf %194, %198 : vector<16x16xf32>
    %200 = vector.extract_strided_slice %158 {offsets = [2, 2], sizes = [16, 16], strides = [1, 1]} : vector<18x18xf32> to vector<16x16xf32>
    %c35 = arith.constant 35 : index
    %201 = memref.load %arg1[%c35] : memref<36xf32, #tpu.memory_space<smem>>
    %202 = vector.broadcast %201 : f32 to vector<16x16xf32>
    %203 = arith.mulf %202, %200 : vector<16x16xf32>
    %204 = arith.addf %199, %203 : vector<16x16xf32>
    %c3_34 = arith.constant 3 : index
    %c0_35 = arith.constant 0 : index
    %c0_36 = arith.constant 0 : index
    %205 = vector.load %arg3[%c3_34, %c0_35, %c0_36] : memref<4x16x16xf32, #tpu.memory_space<vmem>>, vector<1x16x16xf32>
    %206 = vector.shape_cast %205 : vector<1x16x16xf32> to vector<16x16xf32>
    %207 = vector.shape_cast %204 : vector<16x16xf32> to vector<1x16x16xf32>
    tpu.vector_store %arg3[%c3_34, %c0_35, %c0_36], %207 {strides = array<i32>} : memref<4x16x16xf32, #tpu.memory_space<vmem>>, vector<1x16x16xf32>,
    return
  }
}

</mosaic_0001>

<llo_original>
// kernel: tpu_custom_call.1
$region0: #{tpu_custom_call.1}
  #allocation0 [shape = 'u32[]', space=smem, size = 0x4, offset = 0x4, fixed_abs, tag = 'smem constant byte address 0x4 - core index']
  #allocation1 [shape = 'u32[144,128]{1,0:T(1,128)}', space=vmem, size = 0x12000, scoped, tag = 'internal scratch']
  #allocation2 [shape = 'f32[4,18,18]{2,1,0:T(8,128)}', space=vmem, size = 0xc000, scoped, tag = 'scratch operand']
  #allocation3 [shape = 'f32[1]{0:T(128)S(6)}', space=smem, size = 0x200, scoped, tag = 'scoped memory for tpu_custom_call.1']
  %s0 = inlined_call_operand.hbm [shape: f32[4,16,16], index: 0, kind: input, shape index: {}]
  %s1 = inlined_call_operand.vmem [shape: f32[36], index: 1, kind: input, shape index: {}]
  %s2 = inlined_call_operand.<no memory space> [shape: f32[1], index: 2, kind: input, shape index: {}]
  %s3 = inlined_call_operand.hbm [shape: f32[4,16,16], index: 3, kind: output, shape index: {}]
  %s4 = sld [smem:[#allocation0]]
  $region30: #{tpu_custom_call.1} parent=0
    _
  %s6 = ssub.s32 1, %s4
  %s7 = scalar_select 0, %s6, %s4
  %8 = sst [smem:[#allocation3]] %s2
  $region1: #{tpu_custom_call.1} parent=0
    #allocation4 [shape = 'u8[32768]{0}', space=vmem, size = 0x8000, scoped, tag = 'input window, operand 0, single buffered']
    #allocation5 [shape = 's32[1]{0}', space=sflag, size = 0x4, scoped, tag = 'scoped memory for tpu_custom_call.1']
    #allocation6 [shape = 's32[1]{0}', space=sflag, size = 0x4, scoped, tag = 'scoped memory for tpu_custom_call.1']
    #allocation7 [shape = 's32[1]{0}', space=sflag, size = 0x4, scoped, tag = 'scoped memory for tpu_custom_call.1']
    #allocation8 [shape = 'u8[512]{0}', space=smem, size = 0x200, scoped, tag = 'input window, operand 1, single buffered']
    #allocation9 [shape = 'u8[32768]{0}', space=vmem, size = 0x8000, scoped, tag = 'output window, operand 0, single buffered']
    %9 = vsyncpa [#allocation5], 0
    %10 = vsyncpa [#allocation7], 0
    %11 = vsyncpa [#allocation6], 0
    // Predicated region
    $region2: #{tpu_custom_call.1} parent=1 // pred_check
      _
    $region3: #{tpu_custom_call.1} parent=1 // pred_check_branch
      %13 = sbr.rel (0) target = $region5
    $region4: #{tpu_custom_call.1} parent=1 // pred_region
      %s15 = ssub.s32 1024, 1024
      %16 = vsyncadd [#allocation5], %s15
      %s17 = sshll.u32 [#allocation4], 4
      %s18 = int_to_ptr.vmem [resolvable:$true] %s17
      %23 = dma.hbm_to_vmem [thread:$0]  %s0, 1024, %s18, [#allocation5], 128, 128, 8
    $region5: #{tpu_custom_call.1} parent=1 // pred_fallthru
      _
    // Predicated region
    $region6: #{tpu_custom_call.1} parent=1 // pred_check
      _
    $region7: #{tpu_custom_call.1} parent=1 // pred_check_branch
      %25 = sbr.rel (0) target = $region9
    $region8: #{tpu_custom_call.1} parent=1 // pred_region
      %s27 = ssub.s32 16, 16
      %28 = vsyncadd [#allocation7], %s27
      %s30 = sshll.u32 %s1, 4
      %s31 = int_to_ptr.vmem [resolvable:$true] %s30
      %33 = dma.vmem_to_smem %s31, 16, [#allocation8], [#allocation7]
    $region9: #{tpu_custom_call.1} parent=1 // pred_fallthru
      _
    // Predicated region
    $region10: #{tpu_custom_call.1} parent=1 // pred_check
      _
    $region11: #{tpu_custom_call.1} parent=1 // pred_check_branch
      %35 = sbr.rel (0) target = $region13
    $region12: #{tpu_custom_call.1} parent=1 // pred_region
      _
    $region13: #{tpu_custom_call.1} parent=1 // pred_fallthru
      _
    // Predicated region
    $region14: #{tpu_custom_call.1} parent=1 // pred_check
      _
    $region15: #{tpu_custom_call.1} parent=1 // pred_check_branch
      %37 = sbr.rel (0) target = $region17
    $region16: #{tpu_custom_call.1} parent=1 // pred_region
      %38 = dma.done [#allocation5], 1024
    $region17: #{tpu_custom_call.1} parent=1 // pred_fallthru
      _
    // Predicated region
    $region18: #{tpu_custom_call.1} parent=1 // pred_check
      _
    $region19: #{tpu_custom_call.1} parent=1 // pred_check_branch
      %40 = sbr.rel (0) target = $region21
    $region20: #{tpu_custom_call.1} parent=1 // pred_region
      %41 = dma.done [#allocation7], 16
    $region21: #{tpu_custom_call.1} parent=1 // pred_fallthru
      _
    %42 = sfence
    %vm43 = vcmask 146432
    %44 = vst.msk [vmem:[#allocation2] sm:$0xff] %vm43, 0.0
    %45 = vst.msk [vmem:[#allocation2 + $0x8] sm:$0xff] %vm43, 0.0
    %vm46 = vcmask 140288
    %47 = vst.msk [vmem:[#allocation2 + $0x10] sm:$0x3] %vm46, 0.0
    %48 = vst.msk [vmem:[#allocation2 + $0x18] sm:$0xff] %vm43, 0.0
    %49 = vst.msk [vmem:[#allocation2 + $0x20] sm:$0xff] %vm43, 0.0
    %50 = vst.msk [vmem:[#allocation2 + $0x28] sm:$0x3] %vm46, 0.0
    %51 = vst.msk [vmem:[#allocation2 + $0x30] sm:$0xff] %vm43, 0.0
    %52 = vst.msk [vmem:[#allocation2 + $0x38] sm:$0xff] %vm43, 0.0
    %53 = vst.msk [vmem:[#allocation2 + $0x40] sm:$0x3] %vm46, 0.0
    %54 = vst.msk [vmem:[#allocation2 + $0x48] sm:$0xff] %vm43, 0.0
    %55 = vst.msk [vmem:[#allocation2 + $0x50] sm:$0xff] %vm43, 0.0
    %56 = vst.msk [vmem:[#allocation2 + $0x58] sm:$0x3] %vm46, 0.0
    %v57 = vld [vmem:[#allocation4] sm:$0xff]
    %v58 = vld [vmem:[#allocation4 + $0x8] sm:$0xff]
    %v59 = vld [vmem:[#allocation4 + $0x10] sm:$0xff]
    %v60 = vld [vmem:[#allocation4 + $0x18] sm:$0xff]
    %v61 = vld [vmem:[#allocation4 + $0x20] sm:$0xff]
    %v62 = vld [vmem:[#allocation4 + $0x28] sm:$0xff]
    %v63 = vld [vmem:[#allocation4 + $0x30] sm:$0xff]
    %v64 = vld [vmem:[#allocation4 + $0x38] sm:$0xff]
    %73 = vrot.lane.b32.xlu0 %v57, 1
    %v74 = vpop.permute.xlu0 %73
    %75 = vrot.lane.b32.xlu0 %v58, 1
    %v76 = vpop.permute.xlu0 %75
    %77 = vrot.lane.b32.xlu0 %v59, 1
    %v78 = vpop.permute.xlu0 %77
    %79 = vrot.lane.b32.xlu0 %v60, 1
    %v80 = vpop.permute.xlu0 %79
    %81 = vrot.lane.b32.xlu0 %v61, 1
    %v82 = vpop.permute.xlu0 %81
    %83 = vrot.lane.b32.xlu0 %v62, 1
    %v84 = vpop.permute.xlu0 %83
    %85 = vrot.lane.b32.xlu0 %v63, 1
    %v86 = vpop.permute.xlu0 %85
    %87 = vrot.lane.b32.xlu0 %v64, 1
    %v88 = vpop.permute.xlu0 %87
    %vm97 = vcmask 138248
    %98 = vst.msk [vmem:[#allocation2 + $0x1] sm:$0xff] %vm97, %v74
    %99 = vst.msk [vmem:[#allocation2 + $0x9] sm:$0xff] %vm97, %v76
    %100 = vst.msk [vmem:[#allocation2 + $0x19] sm:$0xff] %vm97, %v78
    %101 = vst.msk [vmem:[#allocation2 + $0x21] sm:$0xff] %vm97, %v80
    %102 = vst.msk [vmem:[#allocation2 + $0x31] sm:$0xff] %vm97, %v82
    %103 = vst.msk [vmem:[#allocation2 + $0x39] sm:$0xff] %vm97, %v84
    %104 = vst.msk [vmem:[#allocation2 + $0x49] sm:$0xff] %vm97, %v86
    %105 = vst.msk [vmem:[#allocation2 + $0x51] sm:$0xff] %vm97, %v88
    %v106 = vld [vmem:[#allocation2] sm:$0xff]
    %v107 = vld [vmem:[#allocation2 + $0x8] sm:$0xff]
    %v108 = vld [vmem:[#allocation2 + $0x10] sm:$0x3]
    %s109 = sld [smem:[#allocation8]]
    %v110 = vstv %s109
    %v111 = vmul.f32 %v110, %v106
    %v112 = vmul.f32 %v110, %v107
    %v113 = vadd.f32 %v111, 0.0
    %v114 = vadd.f32 %v112, 0.0
    %s115 = sld [smem:[#allocation8 + $0x1]]
    %v116 = vstv %s115
    %v117 = vmul.f32 %v116, %v106
    %v118 = vmul.f32 %v116, %v107
    %121 = vrot.lane.b32.xlu0 %v117, 127
    %v122 = vpop.permute.xlu0 %121
    %123 = vrot.lane.b32.xlu0 %v118, 127
    %v124 = vpop.permute.xlu0 %123
    %v127 = vadd.f32 %v113, %v122
    %v128 = vadd.f32 %v114, %v124
    %s129 = sld [smem:[#allocation8 + $0x2]]
    %v130 = vstv %s129
    %v131 = vmul.f32 %v130, %v106
    %v132 = vmul.f32 %v130, %v107
    %135 = vrot.lane.b32.xlu0 %v131, 126
    %v136 = vpop.permute.xlu0 %135
    %137 = vrot.lane.b32.xlu0 %v132, 126
    %v138 = vpop.permute.xlu0 %137
    %v141 = vadd.f32 %v127, %v136
    %v142 = vadd.f32 %v128, %v138
    %s143 = sld [smem:[#allocation8 + $0x3]]
    %v144 = vstv %s143
    %v145 = vmul.f32 %v144, %v106
    %v146 = vmul.f32 %v144, %v107
    %v147 = vmul.f32 %v144, %v108
    %vm151 = vcmask 1046528
    %v152 = vrot.slane %v145, 1
    %v153 = vrot.slane %v146, 1
    %v154 = vsel %vm151, %v152, %v153
    %v155 = vrot.slane %v147, 1
    %v156 = vsel %vm151, %v153, %v155
    %v159 = vadd.f32 %v141, %v154
    %v160 = vadd.f32 %v142, %v156
    %s161 = sld [smem:[#allocation8 + $0x4]]
    %v162 = vstv %s161
    %v163 = vmul.f32 %v162, %v106
    %v164 = vmul.f32 %v162, %v107
    %v165 = vmul.f32 %v162, %v108
    %v169 = vrot.slane %v163, 1
    %v170 = vrot.slane %v164, 1
    %v171 = vsel %vm151, %v169, %v170
    %v172 = vrot.slane %v165, 1
    %v173 = vsel %vm151, %v170, %v172
    %174 = vrot.lane.b32.xlu0 %v171, 127
    %v175 = vpop.permute.xlu0 %174
    %176 = vrot.lane.b32.xlu0 %v173, 127
    %v177 = vpop.permute.xlu0 %176
    %v180 = vadd.f32 %v159, %v175
    %v181 = vadd.f32 %v160, %v177
    %s182 = sld [smem:[#allocation8 + $0x5]]
    %v183 = vstv %s182
    %v184 = vmul.f32 %v183, %v106
    %v185 = vmul.f32 %v183, %v107
    %v186 = vmul.f32 %v183, %v108
    %v190 = vrot.slane %v184, 1
    %v191 = vrot.slane %v185, 1
    %v192 = vsel %vm151, %v190, %v191
    %v193 = vrot.slane %v186, 1
    %v194 = vsel %vm151, %v191, %v193
    %195 = vrot.lane.b32.xlu0 %v192, 126
    %v196 = vpop.permute.xlu0 %195
    %197 = vrot.lane.b32.xlu0 %v194, 126
    %v198 = vpop.permute.xlu0 %197
    %v201 = vadd.f32 %v180, %v196
    %v202 = vadd.f32 %v181, %v198
    %s203 = sld [smem:[#allocation8 + $0x6]]
    %v204 = vstv %s203
    %v205 = vmul.f32 %v204, %v106
    %v206 = vmul.f32 %v204, %v107
    %v207 = vmul.f32 %v204, %v108
    %vm211 = vcmask 1045504
    %v212 = vrot.slane %v205, 2
    %v213 = vrot.slane %v206, 2
    %v214 = vsel %vm211, %v212, %v213
    %v215 = vrot.slane %v207, 2
    %v216 = vsel %vm211, %v213, %v215
    %v219 = vadd.f32 %v201, %v214
    %v220 = vadd.f32 %v202, %v216
    %s221 = sld [smem:[#allocation8 + $0x7]]
    %v222 = vstv %s221
    %v223 = vmul.f32 %v222, %v106
    %v224 = vmul.f32 %v222, %v107
    %v225 = vmul.f32 %v222, %v108
    %v229 = vrot.slane %v223, 2
    %v230 = vrot.slane %v224, 2
    %v231 = vsel %vm211, %v229, %v230
    %v232 = vrot.slane %v225, 2
    %v233 = vsel %vm211, %v230, %v232
    %234 = vrot.lane.b32.xlu0 %v231, 127
    %v235 = vpop.permute.xlu0 %234
    %236 = vrot.lane.b32.xlu0 %v233, 127
    %v237 = vpop.permute.xlu0 %236
    %v240 = vadd.f32 %v219, %v235
    %v241 = vadd.f32 %v220, %v237
    %s242 = sld [smem:[#allocation8 + $0x8]]
    %v243 = vstv %s242
    %v244 = vmul.f32 %v243, %v106
    %v245 = vmul.f32 %v243, %v107
    %v246 = vmul.f32 %v243, %v108
    %v250 = vrot.slane %v244, 2
    %v251 = vrot.slane %v245, 2
    %v252 = vsel %vm211, %v250, %v251
    %v253 = vrot.slane %v246, 2
    %v254 = vsel %vm211, %v251, %v253
    %255 = vrot.lane.b32.xlu0 %v252, 126
    %v256 = vpop.permute.xlu0 %255
    %257 = vrot.lane.b32.xlu0 %v254, 126
    %v258 = vpop.permute.xlu0 %257
    %v261 = vadd.f32 %v240, %v256
    %v262 = vadd.f32 %v241, %v258
    %vm263 = vcmask 130048
    %264 = vst.msk [vmem:[#allocation9] sm:$0xff] %vm263, %v261
    %265 = vst.msk [vmem:[#allocation9 + $0x8] sm:$0xff] %vm263, %v262
    %s266 = scalar_lea.vmem [#allocation2], 24
    %v267 = vld [vmem:[%s266] sm:$0xff]
    %v268 = vld [vmem:[%s266 + $0x8] sm:$0xff]
    %v269 = vld [vmem:[%s266 + $0x10] sm:$0x3]
    %s270 = sld [smem:[#allocation8 + $0x9]]
    %v271 = vstv %s270
    %v272 = vmul.f32 %v271, %v267
    %v273 = vmul.f32 %v271, %v268
    %v274 = vadd.f32 %v272, 0.0
    %v275 = vadd.f32 %v273, 0.0
    %s276 = sld [smem:[#allocation8 + $0xa]]
    %v277 = vstv %s276
    %v278 = vmul.f32 %v277, %v267
    %v279 = vmul.f32 %v277, %v268
    %282 = vrot.lane.b32.xlu0 %v278, 127
    %v283 = vpop.permute.xlu0 %282
    %284 = vrot.lane.b32.xlu0 %v279, 127
    %v285 = vpop.permute.xlu0 %284
    %v288 = vadd.f32 %v274, %v283
    %v289 = vadd.f32 %v275, %v285
    %s290 = sld [smem:[#allocation8 + $0xb]]
    %v291 = vstv %s290
    %v292 = vmul.f32 %v291, %v267
    %v293 = vmul.f32 %v291, %v268
    %296 = vrot.lane.b32.xlu0 %v292, 126
    %v297 = vpop.permute.xlu0 %296
    %298 = vrot.lane.b32.xlu0 %v293, 126
    %v299 = vpop.permute.xlu0 %298
    %v302 = vadd.f32 %v288, %v297
    %v303 = vadd.f32 %v289, %v299
    %s304 = sld [smem:[#allocation8 + $0xc]]
    %v305 = vstv %s304
    %v306 = vmul.f32 %v305, %v267
    %v307 = vmul.f32 %v305, %v268
    %v308 = vmul.f32 %v305, %v269
    %v312 = vrot.slane %v306, 1
    %v313 = vrot.slane %v307, 1
    %v314 = vsel %vm151, %v312, %v313
    %v315 = vrot.slane %v308, 1
    %v316 = vsel %vm151, %v313, %v315
    %v319 = vadd.f32 %v302, %v314
    %v320 = vadd.f32 %v303, %v316
    %s321 = sld [smem:[#allocation8 + $0xd]]
    %v322 = vstv %s321
    %v323 = vmul.f32 %v322, %v267
    %v324 = vmul.f32 %v322, %v268
    %v325 = vmul.f32 %v322, %v269
    %v329 = vrot.slane %v323, 1
    %v330 = vrot.slane %v324, 1
    %v331 = vsel %vm151, %v329, %v330
    %v332 = vrot.slane %v325, 1
    %v333 = vsel %vm151, %v330, %v332
    %334 = vrot.lane.b32.xlu0 %v331, 127
    %v335 = vpop.permute.xlu0 %334
    %336 = vrot.lane.b32.xlu0 %v333, 127
    %v337 = vpop.permute.xlu0 %336
    %v340 = vadd.f32 %v319, %v335
    %v341 = vadd.f32 %v320, %v337
    %s342 = sld [smem:[#allocation8 + $0xe]]
    %v343 = vstv %s342
    %v344 = vmul.f32 %v343, %v267
    %v345 = vmul.f32 %v343, %v268
    %v346 = vmul.f32 %v343, %v269
    %v350 = vrot.slane %v344, 1
    %v351 = vrot.slane %v345, 1
    %v352 = vsel %vm151, %v350, %v351
    %v353 = vrot.slane %v346, 1
    %v354 = vsel %vm151, %v351, %v353
    %355 = vrot.lane.b32.xlu0 %v352, 126
    %v356 = vpop.permute.xlu0 %355
    %357 = vrot.lane.b32.xlu0 %v354, 126
    %v358 = vpop.permute.xlu0 %357
    %v361 = vadd.f32 %v340, %v356
    %v362 = vadd.f32 %v341, %v358
    %s363 = sld [smem:[#allocation8 + $0xf]]
    %v364 = vstv %s363
    %v365 = vmul.f32 %v364, %v267
    %v366 = vmul.f32 %v364, %v268
    %v367 = vmul.f32 %v364, %v269
    %v371 = vrot.slane %v365, 2
    %v372 = vrot.slane %v366, 2
    %v373 = vsel %vm211, %v371, %v372
    %v374 = vrot.slane %v367, 2
    %v375 = vsel %vm211, %v372, %v374
    %v378 = vadd.f32 %v361, %v373
    %v379 = vadd.f32 %v362, %v375
    %s380 = sld [smem:[#allocation8 + $0x10]]
    %v381 = vstv %s380
    %v382 = vmul.f32 %v381, %v267
    %v383 = vmul.f32 %v381, %v268
    %v384 = vmul.f32 %v381, %v269
    %v388 = vrot.slane %v382, 2
    %v389 = vrot.slane %v383, 2
    %v390 = vsel %vm211, %v388, %v389
    %v391 = vrot.slane %v384, 2
    %v392 = vsel %vm211, %v389, %v391
    %393 = vrot.lane.b32.xlu0 %v390, 127
    %v394 = vpop.permute.xlu0 %393
    %395 = vrot.lane.b32.xlu0 %v392, 127
    %v396 = vpop.permute.xlu0 %395
    %v399 = vadd.f32 %v378, %v394
    %v400 = vadd.f32 %v379, %v396
    %s401 = sld [smem:[#allocation8 + $0x11]]
    %v402 = vstv %s401
    %v403 = vmul.f32 %v402, %v267
    %v404 = vmul.f32 %v402, %v268
    %v405 = vmul.f32 %v402, %v269
    %v409 = vrot.slane %v403, 2
    %v410 = vrot.slane %v404, 2
    %v411 = vsel %vm211, %v409, %v410
    %v412 = vrot.slane %v405, 2
    %v413 = vsel %vm211, %v410, %v412
    %414 = vrot.lane.b32.xlu0 %v411, 126
    %v415 = vpop.permute.xlu0 %414
    %416 = vrot.lane.b32.xlu0 %v413, 126
    %v417 = vpop.permute.xlu0 %416
    %v420 = vadd.f32 %v399, %v415
    %v421 = vadd.f32 %v400, %v417
    %s422 = scalar_lea.vmem [#allocation9], 16
    %423 = vst.msk [vmem:[%s422] sm:$0xff] %vm263, %v420
    %424 = vst.msk [vmem:[%s422 + $0x8] sm:$0xff] %vm263, %v421
    %s425 = scalar_lea.vmem [#allocation2], 48
    %v426 = vld [vmem:[%s425] sm:$0xff]
    %v427 = vld [vmem:[%s425 + $0x8] sm:$0xff]
    %v428 = vld [vmem:[%s425 + $0x10] sm:$0x3]
    %s429 = sld [smem:[#allocation8 + $0x12]]
    %v430 = vstv %s429
    %v431 = vmul.f32 %v430, %v426
    %v432 = vmul.f32 %v430, %v427
    %v433 = vadd.f32 %v431, 0.0
    %v434 = vadd.f32 %v432, 0.0
    %s435 = sld [smem:[#allocation8 + $0x13]]
    %v436 = vstv %s435
    %v437 = vmul.f32 %v436, %v426
    %v438 = vmul.f32 %v436, %v427
    %441 = vrot.lane.b32.xlu0 %v437, 127
    %v442 = vpop.permute.xlu0 %441
    %443 = vrot.lane.b32.xlu0 %v438, 127
    %v444 = vpop.permute.xlu0 %443
    %v447 = vadd.f32 %v433, %v442
    %v448 = vadd.f32 %v434, %v444
    %s449 = sld [smem:[#allocation8 + $0x14]]
    %v450 = vstv %s449
    %v451 = vmul.f32 %v450, %v426
    %v452 = vmul.f32 %v450, %v427
    %455 = vrot.lane.b32.xlu0 %v451, 126
    %v456 = vpop.permute.xlu0 %455
    %457 = vrot.lane.b32.xlu0 %v452, 126
    %v458 = vpop.permute.xlu0 %457
    %v461 = vadd.f32 %v447, %v456
    %v462 = vadd.f32 %v448, %v458
    %s463 = sld [smem:[#allocation8 + $0x15]]
    %v464 = vstv %s463
    %v465 = vmul.f32 %v464, %v426
    %v466 = vmul.f32 %v464, %v427
    %v467 = vmul.f32 %v464, %v428
    %v471 = vrot.slane %v465, 1
    %v472 = vrot.slane %v466, 1
    %v473 = vsel %vm151, %v471, %v472
    %v474 = vrot.slane %v467, 1
    %v475 = vsel %vm151, %v472, %v474
    %v478 = vadd.f32 %v461, %v473
    %v479 = vadd.f32 %v462, %v475
    %s480 = sld [smem:[#allocation8 + $0x16]]
    %v481 = vstv %s480
    %v482 = vmul.f32 %v481, %v426
    %v483 = vmul.f32 %v481, %v427
    %v484 = vmul.f32 %v481, %v428
    %v488 = vrot.slane %v482, 1
    %v489 = vrot.slane %v483, 1
    %v490 = vsel %vm151, %v488, %v489
    %v491 = vrot.slane %v484, 1
    %v492 = vsel %vm151, %v489, %v491
    %493 = vrot.lane.b32.xlu0 %v490, 127
    %v494 = vpop.permute.xlu0 %493
    %495 = vrot.lane.b32.xlu0 %v492, 127
    %v496 = vpop.permute.xlu0 %495
    %v499 = vadd.f32 %v478, %v494
    %v500 = vadd.f32 %v479, %v496
    %s501 = sld [smem:[#allocation8 + $0x17]]
    %v502 = vstv %s501
    %v503 = vmul.f32 %v502, %v426
    %v504 = vmul.f32 %v502, %v427
    %v505 = vmul.f32 %v502, %v428
    %v509 = vrot.slane %v503, 1
    %v510 = vrot.slane %v504, 1
    %v511 = vsel %vm151, %v509, %v510
    %v512 = vrot.slane %v505, 1
    %v513 = vsel %vm151, %v510, %v512
    %514 = vrot.lane.b32.xlu0 %v511, 126
    %v515 = vpop.permute.xlu0 %514
    %516 = vrot.lane.b32.xlu0 %v513, 126
    %v517 = vpop.permute.xlu0 %516
    %v520 = vadd.f32 %v499, %v515
    %v521 = vadd.f32 %v500, %v517
    %s522 = sld [smem:[#allocation8 + $0x18]]
    %v523 = vstv %s522
    %v524 = vmul.f32 %v523, %v426
    %v525 = vmul.f32 %v523, %v427
    %v526 = vmul.f32 %v523, %v428
    %v530 = vrot.slane %v524, 2
    %v531 = vrot.slane %v525, 2
    %v532 = vsel %vm211, %v530, %v531
    %v533 = vrot.slane %v526, 2
    %v534 = vsel %vm211, %v531, %v533
    %v537 = vadd.f32 %v520, %v532
    %v538 = vadd.f32 %v521, %v534
    %s539 = sld [smem:[#allocation8 + $0x19]]
    %v540 = vstv %s539
    %v541 = vmul.f32 %v540, %v426
    %v542 = vmul.f32 %v540, %v427
    %v543 = vmul.f32 %v540, %v428
    %v547 = vrot.slane %v541, 2
    %v548 = vrot.slane %v542, 2
    %v549 = vsel %vm211, %v547, %v548
    %v550 = vrot.slane %v543, 2
    %v551 = vsel %vm211, %v548, %v550
    %552 = vrot.lane.b32.xlu0 %v549, 127
    %v553 = vpop.permute.xlu0 %552
    %554 = vrot.lane.b32.xlu0 %v551, 127
    %v555 = vpop.permute.xlu0 %554
    %v558 = vadd.f32 %v537, %v553
    %v559 = vadd.f32 %v538, %v555
    %s560 = sld [smem:[#allocation8 + $0x1a]]
    %v561 = vstv %s560
    %v562 = vmul.f32 %v561, %v426
    %v563 = vmul.f32 %v561, %v427
    %v564 = vmul.f32 %v561, %v428
    %v568 = vrot.slane %v562, 2
    %v569 = vrot.slane %v563, 2
    %v570 = vsel %vm211, %v568, %v569
    %v571 = vrot.slane %v564, 2
    %v572 = vsel %vm211, %v569, %v571
    %573 = vrot.lane.b32.xlu0 %v570, 126
    %v574 = vpop.permute.xlu0 %573
    %575 = vrot.lane.b32.xlu0 %v572, 126
    %v576 = vpop.permute.xlu0 %575
    %v579 = vadd.f32 %v558, %v574
    %v580 = vadd.f32 %v559, %v576
    %s581 = scalar_lea.vmem [#allocation9], 32
    %582 = vst.msk [vmem:[%s581] sm:$0xff] %vm263, %v579
    %583 = vst.msk [vmem:[%s581 + $0x8] sm:$0xff] %vm263, %v580
    %s584 = scalar_lea.vmem [#allocation2], 72
    %v585 = vld [vmem:[%s584] sm:$0xff]
    %v586 = vld [vmem:[%s584 + $0x8] sm:$0xff]
    %v587 = vld [vmem:[%s584 + $0x10] sm:$0x3]
    %s588 = sld [smem:[#allocation8 + $0x1b]]
    %v589 = vstv %s588
    %v590 = vmul.f32 %v589, %v585
    %v591 = vmul.f32 %v589, %v586
    %v592 = vadd.f32 %v590, 0.0
    %v593 = vadd.f32 %v591, 0.0
    %s594 = sld [smem:[#allocation8 + $0x1c]]
    %v595 = vstv %s594
    %v596 = vmul.f32 %v595, %v585
    %v597 = vmul.f32 %v595, %v586
    %600 = vrot.lane.b32.xlu0 %v596, 127
    %v601 = vpop.permute.xlu0 %600
    %602 = vrot.lane.b32.xlu0 %v597, 127
    %v603 = vpop.permute.xlu0 %602
    %v606 = vadd.f32 %v592, %v601
    %v607 = vadd.f32 %v593, %v603
    %s608 = sld [smem:[#allocation8 + $0x1d]]
    %v609 = vstv %s608
    %v610 = vmul.f32 %v609, %v585
    %v611 = vmul.f32 %v609, %v586
    %614 = vrot.lane.b32.xlu0 %v610, 126
    %v615 = vpop.permute.xlu0 %614
    %616 = vrot.lane.b32.xlu0 %v611, 126
    %v617 = vpop.permute.xlu0 %616
    %v620 = vadd.f32 %v606, %v615
    %v621 = vadd.f32 %v607, %v617
    %s622 = sld [smem:[#allocation8 + $0x1e]]
    %v623 = vstv %s622
    %v624 = vmul.f32 %v623, %v585
    %v625 = vmul.f32 %v623, %v586
    %v626 = vmul.f32 %v623, %v587
    %v630 = vrot.slane %v624, 1
    %v631 = vrot.slane %v625, 1
    %v632 = vsel %vm151, %v630, %v631
    %v633 = vrot.slane %v626, 1
    %v634 = vsel %vm151, %v631, %v633
    %v637 = vadd.f32 %v620, %v632
    %v638 = vadd.f32 %v621, %v634
    %s639 = sld [smem:[#allocation8 + $0x1f]]
    %v640 = vstv %s639
    %v641 = vmul.f32 %v640, %v585
    %v642 = vmul.f32 %v640, %v586
    %v643 = vmul.f32 %v640, %v587
    %v647 = vrot.slane %v641, 1
    %v648 = vrot.slane %v642, 1
    %v649 = vsel %vm151, %v647, %v648
    %v650 = vrot.slane %v643, 1
    %v651 = vsel %vm151, %v648, %v650
    %652 = vrot.lane.b32.xlu0 %v649, 127
    %v653 = vpop.permute.xlu0 %652
    %654 = vrot.lane.b32.xlu0 %v651, 127
    %v655 = vpop.permute.xlu0 %654
    %v658 = vadd.f32 %v637, %v653
    %v659 = vadd.f32 %v638, %v655
    %s660 = sld [smem:[#allocation8 + $0x20]]
    %v661 = vstv %s660
    %v662 = vmul.f32 %v661, %v585
    %v663 = vmul.f32 %v661, %v586
    %v664 = vmul.f32 %v661, %v587
    %v668 = vrot.slane %v662, 1
    %v669 = vrot.slane %v663, 1
    %v670 = vsel %vm151, %v668, %v669
    %v671 = vrot.slane %v664, 1
    %v672 = vsel %vm151, %v669, %v671
    %673 = vrot.lane.b32.xlu0 %v670, 126
    %v674 = vpop.permute.xlu0 %673
    %675 = vrot.lane.b32.xlu0 %v672, 126
    %v676 = vpop.permute.xlu0 %675
    %v679 = vadd.f32 %v658, %v674
    %v680 = vadd.f32 %v659, %v676
    %s681 = sld [smem:[#allocation8 + $0x21]]
    %v682 = vstv %s681
    %v683 = vmul.f32 %v682, %v585
    %v684 = vmul.f32 %v682, %v586
    %v685 = vmul.f32 %v682, %v587
    %v689 = vrot.slane %v683, 2
    %v690 = vrot.slane %v684, 2
    %v691 = vsel %vm211, %v689, %v690
    %v692 = vrot.slane %v685, 2
    %v693 = vsel %vm211, %v690, %v692
    %v696 = vadd.f32 %v679, %v691
    %v697 = vadd.f32 %v680, %v693
    %s698 = sld [smem:[#allocation8 + $0x22]]
    %v699 = vstv %s698
    %v700 = vmul.f32 %v699, %v585
    %v701 = vmul.f32 %v699, %v586
    %v702 = vmul.f32 %v699, %v587
    %v706 = vrot.slane %v700, 2
    %v707 = vrot.slane %v701, 2
    %v708 = vsel %vm211, %v706, %v707
    %v709 = vrot.slane %v702, 2
    %v710 = vsel %vm211, %v707, %v709
    %711 = vrot.lane.b32.xlu0 %v708, 127
    %v712 = vpop.permute.xlu0 %711
    %713 = vrot.lane.b32.xlu0 %v710, 127
    %v714 = vpop.permute.xlu0 %713
    %v717 = vadd.f32 %v696, %v712
    %v718 = vadd.f32 %v697, %v714
    %s719 = sld [smem:[#allocation8 + $0x23]]
    %v720 = vstv %s719
    %v721 = vmul.f32 %v720, %v585
    %v722 = vmul.f32 %v720, %v586
    %v723 = vmul.f32 %v720, %v587
    %v727 = vrot.slane %v721, 2
    %v728 = vrot.slane %v722, 2
    %v729 = vsel %vm211, %v727, %v728
    %v730 = vrot.slane %v723, 2
    %v731 = vsel %vm211, %v728, %v730
    %732 = vrot.lane.b32.xlu0 %v729, 126
    %v733 = vpop.permute.xlu0 %732
    %734 = vrot.lane.b32.xlu0 %v731, 126
    %v735 = vpop.permute.xlu0 %734
    %v738 = vadd.f32 %v717, %v733
    %v739 = vadd.f32 %v718, %v735
    %s740 = scalar_lea.vmem [#allocation9], 48
    %741 = vst.msk [vmem:[%s740] sm:$0xff] %vm263, %v738
    %742 = vst.msk [vmem:[%s740 + $0x8] sm:$0xff] %vm263, %v739
    // Predicated region
    $region22: #{tpu_custom_call.1} parent=1 // pred_check
      _
    $region23: #{tpu_custom_call.1} parent=1 // pred_check_branch
      %744 = sbr.rel (0) target = $region25
    $region24: #{tpu_custom_call.1} parent=1 // pred_region
      %s746 = ssub.s32 1024, 1024
      %747 = vsyncadd [#allocation6], %s746
      %s748 = sshll.u32 [#allocation9], 4
      %s749 = int_to_ptr.vmem [resolvable:$true] %s748
      %754 = dma.vmem_to_hbm [thread:$0]  %s749, 1024, %s3, [#allocation6], 128, 128, 8
    $region25: #{tpu_custom_call.1} parent=1 // pred_fallthru
      _
    // Predicated region
    $region26: #{tpu_custom_call.1} parent=1 // pred_check
      _
    $region27: #{tpu_custom_call.1} parent=1 // pred_check_branch
      %756 = sbr.rel (0) target = $region29
    $region28: #{tpu_custom_call.1} parent=1 // pred_region
      %757 = dma.done [#allocation6], 1024
    $region29: #{tpu_custom_call.1} parent=1 // pred_fallthru
      _
    %758 = vsyncpa [#allocation5], 1
    %759 = vsyncpa [#allocation6], 1
    %760 = vsyncpa [#allocation7], 1

</llo_original>
